<compile_context>
chip_gen: v7x
topology: tpu7x:2x2x1
jax: 0.10.0
libtpu: 0.0.40
codegen_flags: <defaults>
</compile_context>

<pallas_src>
import functools

import jax
import jax.numpy as jnp
from jax.experimental import pallas as pl
from jax.experimental.pallas import tpu as pltpu


def _inverse_block_kernel(
    x_ref,     # (N*H, W*Cin)   lane layout: w*Cin + ci
    wa_ref,    # (W*Cin, 2*W*C) [kron(I_W, w0^T) | kron(I_W, w2^T)]
    ba_ref,    # (1, 2*W*C)     [tile(b0, W) | tile(b2, W)]
    wdw_ref,   # (9, W*C)       depthwise taps (ky*3+kx major), W-boundary
               #                (kx) masks already folded in
    bdw_ref,   # (1, W*C)
    w1_ref,    # (W*C, W*C)     kron(I_W, w1^T)
    b1_ref,    # (1, W*C)
    o_ref,     # (N*H, W*C)
    *, H, W, C,
):
    R = x_ref.shape[0]          # N*H rows (sublane axis)
    WC = W * C                  # lane axis of activations

    x = x_ref[...]              # (R, W*Cin)

    # ---- fused conv0 || conv2: one lane-dense MXU matmul ----
    fg = jnp.dot(x, wa_ref[...], preferred_element_type=jnp.float32)
    fg = fg + ba_ref[...]
    f = fg[:, :WC]                          # conv0(x), (R, WC)
    g = jnp.maximum(fg[:, WC:], 0.0)        # relu(conv2(x)), (R, WC)

    # ---- depthwise 3x3 (padding=1), fully in registers ----
    # row r = n*H + h ; lane l = w*C + c.
    # Only the row (h) boundary masks remain in-kernel (the sublane roll wraps
    # across batch boundaries, so these must NOT be folded into the taps).
    h_ids = jax.lax.broadcasted_iota(jnp.int32, (R, WC), 0) % H
    top_ok = (h_ids != 0).astype(jnp.float32)         # valid for dy == -1
    bot_ok = (h_ids != (H - 1)).astype(jnp.float32)   # valid for dy == +1

    acc = jnp.zeros((R, WC), jnp.float32)
    for ky in range(3):
        for kx in range(3):
            dy, dx = ky - 1, kx - 1
            t = f
            if dy != 0:
                # want t[r] = f[r + dy]  ->  roll by -dy (sublane axis)
                t = pltpu.roll(t, shift=(-dy) % R, axis=0)
            if dx != 0:
                # want t[:, l] = f[:, l + dx*C]  ->  roll by -dx*C lanes
                t = pltpu.roll(t, shift=(-dx * C) % WC, axis=1)
            if dy == -1:
                t = t * top_ok
            elif dy == 1:
                t = t * bot_ok
            # W (lane) boundary zeros are baked into the packed taps.
            k = ky * 3 + kx
            tap = wdw_ref[k:k + 1, :]        # (1, WC) load straight from VMEM
            acc = acc + t * tap

    dw = acc + bdw_ref[...]
    # ELU (alpha=1).  exp runs on the EUP slot; exp(x)-1 matches the reference
    # and is within tolerance of expm1 near zero.
    dw = jnp.where(dw > 0, dw, jnp.exp(dw) - 1.0)

    # ---- conv1: lane-dense block-diagonal MXU matmul ----
    f1 = jnp.dot(dw, w1_ref[...], preferred_element_type=jnp.float32)
    f1 = f1 + b1_ref[...]

    o_ref[...] = (g + f1).astype(o_ref.dtype)   # full-lane (128-wide) store


def prepack_params(w0, b0, wdw, bdw, w1, b1, w2, b2, *, W):
    """Build the packed constant tensors ONCE (module-init time, not per call).

    Parameters are in PyTorch nn.Conv2d layouts:
      w0: (C, Cin, 1, 1)  b0: (C,)
      wdw:(C, 1, 3, 3)    bdw:(C,)
      w1: (C, C, 1, 1)    b1: (C,)
      w2: (C, Cin, 1, 1)  b2: (C,)
    """
    f32 = jnp.float32
    C, Cin = w0.shape[0], w0.shape[1]

    eye_w = jnp.eye(W, dtype=f32)
    w0_t = w0.reshape(C, Cin).T.astype(f32)       # (Cin, C)
    w1_t = w1.reshape(C, C).T.astype(f32)         # (C, C)
    w2_t = w2.reshape(C, Cin).T.astype(f32)       # (Cin, C)

    # Fused conv0||conv2 block-diagonal weight: (W*Cin, 2*W*C).
    wa = jnp.concatenate([jnp.kron(eye_w, w0_t), jnp.kron(eye_w, w2_t)], axis=1)
    ba = jnp.concatenate(
        [jnp.tile(b0.astype(f32), W), jnp.tile(b2.astype(f32), W)])[None, :]

    # conv1 block-diagonal weight: (W*C, W*C).
    w1_bd = jnp.kron(eye_w, w1_t)
    b1_t = jnp.tile(b1.astype(f32), W)[None, :]

    # Depthwise taps: (9, C) taps-major (row = ky*3+kx), tiled to (9, W*C),
    # with the kx (lane / W-axis) boundary masks folded in:
    #   kx==0 (dx=-1) reads w-1 -> invalid at w==0    -> zero lanes w==0
    #   kx==2 (dx=+1) reads w+1 -> invalid at w==W-1  -> zero lanes w==W-1
    wdw_t = jnp.tile(wdw.reshape(C, 9).T.astype(f32), (1, W))
    lane_w = jnp.arange(W * C) // C                     # lane -> w index
    kx_row = jnp.arange(9) % 3                          # tap row -> kx
    keep = jnp.where((kx_row[:, None] == 0) & (lane_w[None, :] == 0), 0.0, 1.0)
    keep = keep * jnp.where(
        (kx_row[:, None] == 2) & (lane_w[None, :] == W - 1), 0.0, 1.0)
    wdw_t = wdw_t * keep.astype(f32)
    bdw_t = jnp.tile(bdw.astype(f32), W)[None, :]

    return (wa, ba, wdw_t, bdw_t, w1_bd, b1_t)


@jax.jit
def inverse_block(x, packed):
    """x: (N, Cin, H, W) NCHW float; packed = prepack_params(...). NCHW out."""
    wa, ba, wdw_t, bdw_t, w1_bd, b1_t = packed
    N, Cin, H, W = x.shape
    C = bdw_t.shape[1] // W
    R, WC = N * H, W * C
    f32 = jnp.float32

    # NCHW -> lane-dense (N*H, W*Cin) slab.  Kept here only to honour the
    # PyTorch module's NCHW contract; feed/consume slabs directly if the
    # surrounding graph allows.
    x_slab = jnp.transpose(x, (0, 2, 3, 1)).reshape(R, W * Cin).astype(f32)

    kernel = functools.partial(_inverse_block_kernel, H=H, W=W, C=C)
    vmem = lambda: pl.BlockSpec(memory_space=pltpu.MemorySpace.VMEM)

    flops = 2 * R * (W * Cin) * (2 * WC) + 2 * R * WC * WC + 2 * 9 * R * WC
    bytes_accessed = 4 * (x_slab.size + wa.size + ba.size + wdw_t.size
                          + bdw_t.size + w1_bd.size + b1_t.size + R * WC)

    out_slab = pl.pallas_call(
        kernel,
        out_shape=jax.ShapeDtypeStruct((R, WC), f32),
        in_specs=[vmem() for _ in range(7)],
        out_specs=vmem(),
        cost_estimate=pl.CostEstimate(
            flops=flops, transcendentals=R * WC, bytes_accessed=bytes_accessed),
    )(x_slab, wa, ba, wdw_t, bdw_t, w1_bd, b1_t)

    # (N*H, W*C) -> NCHW
    return jnp.transpose(out_slab.reshape(N, H, W, C), (0, 3, 1, 2))


def _ref_forward(x, w0, b0, wdw, bdw, w1, b1, w2, b2):
    """Pure-JAX (XLA) reference of the same math, from PyTorch-layout params."""
    N, Cin, H, W = x.shape
    C = w0.shape[0]
    xt = jnp.transpose(x, (0, 2, 3, 1))                    # NHWC
    w0_t = w0.reshape(C, Cin).T
    w1_t = w1.reshape(C, C).T
    w2_t = w2.reshape(C, Cin).T
    f = jnp.einsum("nhwc,cd->nhwd", xt, w0_t) + b0
    fp = jnp.pad(f, ((0, 0), (1, 1), (1, 1), (0, 0)))
    acc = jnp.zeros_like(f)
    for ky in range(3):
        for kx in range(3):
            acc = acc + fp[:, ky:ky + H, kx:kx + W, :] * wdw[:, 0, ky, kx]
    dw = acc + bdw
    dw = jnp.where(dw > 0, dw, jnp.exp(dw) - 1.0)
    f1 = jnp.einsum("nhwc,cd->nhwd", dw, w1_t) + b1
    g = jnp.maximum(jnp.einsum("nhwc,cd->nhwd", xt, w2_t) + b2, 0.0)
    return jnp.transpose(g + f1, (0, 3, 1, 2))             # back to NCHW


if __name__ == "__main__":
    # Small shapes consistent with the module: batch=2, input_channels=4,
    # channels=8, spatial 16x16 (W*C = 128 -> lane-dense slabs).
    N, Cin, C, H, W = 2, 4, 8, 16, 16

    key = jax.random.PRNGKey(0)
    ks = jax.random.split(key, 9)

    x = jax.random.normal(ks[0], (N, Cin, H, W), jnp.float32)

    # Parameters in nn.Conv2d layouts.
    w0 = 0.2 * jax.random.normal(ks[1], (C, Cin, 1, 1), jnp.float32)
    b0 = 0.1 * jax.random.normal(ks[2], (C,), jnp.float32)
    wdw = 0.2 * jax.random.normal(ks[3], (C, 1, 3, 3), jnp.float32)
    bdw = 0.1 * jax.random.normal(ks[4], (C,), jnp.float32)
    w1 = 0.2 * jax.random.normal(ks[5], (C, C, 1, 1), jnp.float32)
    b1 = 0.1 * jax.random.normal(ks[6], (C,), jnp.float32)
    w2 = 0.2 * jax.random.normal(ks[7], (C, Cin, 1, 1), jnp.float32)
    b2 = 0.1 * jax.random.normal(ks[8], (C,), jnp.float32)

    # Pack constants once (init-time), then call the jitted forward.
    packed = jax.block_until_ready(
        prepack_params(w0, b0, wdw, bdw, w1, b1, w2, b2, W=W))

    out = jax.block_until_ready(inverse_block(x, packed))
    ref = _ref_forward(x, w0, b0, wdw, bdw, w1, b1, w2, b2)

    assert out.shape == (N, C, H, W), out.shape
    assert jnp.allclose(out, ref, atol=1e-4, rtol=1e-4), (
        float(jnp.max(jnp.abs(out - ref))))

    print("KERNEL_OK")
</pallas_src>

<mosaic_0001>
module attributes {stable_mosaic.version = 11 : i64} {
  func.func @_inverse_block_kernel(%arg0: memref<32x64xf32, #tpu.memory_space<vmem>>, %arg1: memref<64x256xf32, #tpu.memory_space<vmem>>, %arg2: memref<1x256xf32, #tpu.memory_space<vmem>>, %arg3: memref<9x128xf32, #tpu.memory_space<vmem>>, %arg4: memref<1x128xf32, #tpu.memory_space<vmem>>, %arg5: memref<128x128xf32, #tpu.memory_space<vmem>>, %arg6: memref<1x128xf32, #tpu.memory_space<vmem>>, %arg7: memref<32x128xf32, #tpu.memory_space<vmem>>) attributes {dimension_semantics = [], scalar_prefetch = 0 : i64, scratch_operands = 0 : i64, tpu.core_type = #tpu.core_type<tc>} {
    %c0 = arith.constant 0 : index
    %c0_0 = arith.constant 0 : index
    %0 = vector.load %arg0[%c0, %c0_0] : memref<32x64xf32, #tpu.memory_space<vmem>>, vector<32x64xf32>
    %c0_1 = arith.constant 0 : index
    %c0_2 = arith.constant 0 : index
    %1 = vector.load %arg1[%c0_1, %c0_2] : memref<64x256xf32, #tpu.memory_space<vmem>>, vector<64x256xf32>
    %cst = arith.constant dense<0.000000e+00> : vector<32x256xf32>
    %2 = tpu.matmul %0, %1, %cst {dimension_numbers = #tpu.dot_dimension_numbers<[1], [0], [0], [1], [0, 0, 1, 1], [], []>} : vector<32x64xf32>, vector<64x256xf32>, vector<32x256xf32> -> vector<32x256xf32>
    %c0_3 = arith.constant 0 : index
    %c0_4 = arith.constant 0 : index
    %3 = vector.load %arg2[%c0_3, %c0_4] : memref<1x256xf32, #tpu.memory_space<vmem>>, vector<1x256xf32>
    %4 = vector.broadcast %3 : vector<1x256xf32> to vector<32x256xf32>
    %5 = arith.addf %2, %4 : vector<32x256xf32>
    %6 = vector.extract_strided_slice %5 {offsets = [0, 0], sizes = [32, 128], strides = [1, 1]} : vector<32x256xf32> to vector<32x128xf32>
    %7 = vector.extract_strided_slice %5 {offsets = [0, 128], sizes = [32, 128], strides = [1, 1]} : vector<32x256xf32> to vector<32x128xf32>
    %cst_5 = arith.constant 0.000000e+00 : f32
    %8 = vector.broadcast %cst_5 : f32 to vector<32x128xf32>
    %9 = arith.maximumf %7, %8 : vector<32x128xf32>
    %10 = tpu.iota {dimensions = array<i32: 0>} : vector<32x128xi32>
    %c16_i32 = arith.constant 16 : i32
    %c0_i32 = arith.constant 0 : i32
    %11 = arith.cmpi eq, %c16_i32, %c0_i32 : i32
    %c1_i32 = arith.constant 1 : i32
    %12 = arith.select %11, %c1_i32, %c16_i32 : i32
    %13 = vector.broadcast %12 : i32 to vector<32x128xi32>
    %14 = arith.remsi %10, %13 : vector<32x128xi32>
    %c0_i32_6 = arith.constant 0 : i32
    %15 = vector.broadcast %c0_i32_6 : i32 to vector<32x128xi32>
    %16 = arith.cmpi ne, %14, %15 : vector<32x128xi32>
    %c0_i32_7 = arith.constant 0 : i32
    %17 = vector.broadcast %c0_i32_7 : i32 to vector<32x128xi32>
    %18 = arith.cmpi slt, %14, %17 : vector<32x128xi32>
    %c0_i32_8 = arith.constant 0 : i32
    %19 = arith.cmpi slt, %12, %c0_i32_8 : i32
    %20 = vector.broadcast %19 : i1 to vector<32x128xi1>
    %21 = vector.broadcast %20 : vector<32x128xi1> to vector<32x128xi1>
    %22 = arith.xori %18, %21 : vector<32x128xi1>
    %23 = arith.andi %22, %16 : vector<32x128xi1>
    %24 = vector.broadcast %12 : i32 to vector<32x128xi32>
    %25 = arith.addi %14, %24 : vector<32x128xi32>
    %26 = arith.select %23, %25, %14 : vector<32x128xi1>, vector<32x128xi32>
    %c0_i32_9 = arith.constant 0 : i32
    %27 = vector.broadcast %c0_i32_9 : i32 to vector<32x128xi32>
    %28 = arith.cmpi ne, %26, %27 : vector<32x128xi32>
    %29 = arith.extui %28 : vector<32x128xi1> to vector<32x128xi32>
    %30 = arith.sitofp %29 : vector<32x128xi32> to vector<32x128xf32>
    %c15_i32 = arith.constant 15 : i32
    %31 = vector.broadcast %c15_i32 : i32 to vector<32x128xi32>
    %32 = arith.cmpi ne, %26, %31 : vector<32x128xi32>
    %33 = arith.extui %32 : vector<32x128xi1> to vector<32x128xi32>
    %34 = arith.sitofp %33 : vector<32x128xi32> to vector<32x128xf32>
    %cst_10 = arith.constant 0.000000e+00 : f32
    %35 = vector.broadcast %cst_10 : f32 to vector<32x128xf32>
    %c1_i32_11 = arith.constant 1 : i32
    %36 = tpu.dynamic_rotate %6 by %c1_i32_11 dim 0 : vector<32x128xf32>, i32 -> vector<32x128xf32>
    %c8_i32 = arith.constant 8 : i32
    %37 = tpu.dynamic_rotate %36 by %c8_i32 dim 1 : vector<32x128xf32>, i32 -> vector<32x128xf32>
    %38 = arith.mulf %37, %30 : vector<32x128xf32>
    %c0_12 = arith.constant 0 : index
    %c0_13 = arith.constant 0 : index
    %39 = vector.load %arg3[%c0_12, %c0_13] : memref<9x128xf32, #tpu.memory_space<vmem>>, vector<1x128xf32>
    %40 = vector.broadcast %39 : vector<1x128xf32> to vector<32x128xf32>
    %41 = arith.mulf %38, %40 : vector<32x128xf32>
    %42 = arith.addf %35, %41 : vector<32x128xf32>
    %c1_i32_14 = arith.constant 1 : i32
    %43 = tpu.dynamic_rotate %6 by %c1_i32_14 dim 0 : vector<32x128xf32>, i32 -> vector<32x128xf32>
    %44 = arith.mulf %43, %30 : vector<32x128xf32>
    %c1 = arith.constant 1 : index
    %c0_15 = arith.constant 0 : index
    %45 = vector.load %arg3[%c1, %c0_15] : memref<9x128xf32, #tpu.memory_space<vmem>>, vector<1x128xf32>
    %46 = vector.broadcast %45 : vector<1x128xf32> to vector<32x128xf32>
    %47 = arith.mulf %44, %46 : vector<32x128xf32>
    %48 = arith.addf %42, %47 : vector<32x128xf32>
    %c1_i32_16 = arith.constant 1 : i32
    %49 = tpu.dynamic_rotate %6 by %c1_i32_16 dim 0 : vector<32x128xf32>, i32 -> vector<32x128xf32>
    %c120_i32 = arith.constant 120 : i32
    %50 = tpu.dynamic_rotate %49 by %c120_i32 dim 1 : vector<32x128xf32>, i32 -> vector<32x128xf32>
    %51 = arith.mulf %50, %30 : vector<32x128xf32>
    %c2 = arith.constant 2 : index
    %c0_17 = arith.constant 0 : index
    %52 = vector.load %arg3[%c2, %c0_17] : memref<9x128xf32, #tpu.memory_space<vmem>>, vector<1x128xf32>
    %53 = vector.broadcast %52 : vector<1x128xf32> to vector<32x128xf32>
    %54 = arith.mulf %51, %53 : vector<32x128xf32>
    %55 = arith.addf %48, %54 : vector<32x128xf32>
    %c8_i32_18 = arith.constant 8 : i32
    %56 = tpu.dynamic_rotate %6 by %c8_i32_18 dim 1 : vector<32x128xf32>, i32 -> vector<32x128xf32>
    %c3 = arith.constant 3 : index
    %c0_19 = arith.constant 0 : index
    %57 = vector.load %arg3[%c3, %c0_19] : memref<9x128xf32, #tpu.memory_space<vmem>>, vector<1x128xf32>
    %58 = vector.broadcast %57 : vector<1x128xf32> to vector<32x128xf32>
    %59 = arith.mulf %56, %58 : vector<32x128xf32>
    %60 = arith.addf %55, %59 : vector<32x128xf32>
    %c4 = arith.constant 4 : index
    %c0_20 = arith.constant 0 : index
    %61 = vector.load %arg3[%c4, %c0_20] : memref<9x128xf32, #tpu.memory_space<vmem>>, vector<1x128xf32>
    %62 = vector.broadcast %61 : vector<1x128xf32> to vector<32x128xf32>
    %63 = arith.mulf %6, %62 : vector<32x128xf32>
    %64 = arith.addf %60, %63 : vector<32x128xf32>
    %c120_i32_21 = arith.constant 120 : i32
    %65 = tpu.dynamic_rotate %6 by %c120_i32_21 dim 1 : vector<32x128xf32>, i32 -> vector<32x128xf32>
    %c5 = arith.constant 5 : index
    %c0_22 = arith.constant 0 : index
    %66 = vector.load %arg3[%c5, %c0_22] : memref<9x128xf32, #tpu.memory_space<vmem>>, vector<1x128xf32>
    %67 = vector.broadcast %66 : vector<1x128xf32> to vector<32x128xf32>
    %68 = arith.mulf %65, %67 : vector<32x128xf32>
    %69 = arith.addf %64, %68 : vector<32x128xf32>
    %c31_i32 = arith.constant 31 : i32
    %70 = tpu.dynamic_rotate %6 by %c31_i32 dim 0 : vector<32x128xf32>, i32 -> vector<32x128xf32>
    %c8_i32_23 = arith.constant 8 : i32
    %71 = tpu.dynamic_rotate %70 by %c8_i32_23 dim 1 : vector<32x128xf32>, i32 -> vector<32x128xf32>
    %72 = arith.mulf %71, %34 : vector<32x128xf32>
    %c6 = arith.constant 6 : index
    %c0_24 = arith.constant 0 : index
    %73 = vector.load %arg3[%c6, %c0_24] : memref<9x128xf32, #tpu.memory_space<vmem>>, vector<1x128xf32>
    %74 = vector.broadcast %73 : vector<1x128xf32> to vector<32x128xf32>
    %75 = arith.mulf %72, %74 : vector<32x128xf32>
    %76 = arith.addf %69, %75 : vector<32x128xf32>
    %c31_i32_25 = arith.constant 31 : i32
    %77 = tpu.dynamic_rotate %6 by %c31_i32_25 dim 0 : vector<32x128xf32>, i32 -> vector<32x128xf32>
    %78 = arith.mulf %77, %34 : vector<32x128xf32>
    %c7 = arith.constant 7 : index
    %c0_26 = arith.constant 0 : index
    %79 = vector.load %arg3[%c7, %c0_26] : memref<9x128xf32, #tpu.memory_space<vmem>>, vector<1x128xf32>
    %80 = vector.broadcast %79 : vector<1x128xf32> to vector<32x128xf32>
    %81 = arith.mulf %78, %80 : vector<32x128xf32>
    %82 = arith.addf %76, %81 : vector<32x128xf32>
    %c31_i32_27 = arith.constant 31 : i32
    %83 = tpu.dynamic_rotate %6 by %c31_i32_27 dim 0 : vector<32x128xf32>, i32 -> vector<32x128xf32>
    %c120_i32_28 = arith.constant 120 : i32
    %84 = tpu.dynamic_rotate %83 by %c120_i32_28 dim 1 : vector<32x128xf32>, i32 -> vector<32x128xf32>
    %85 = arith.mulf %84, %34 : vector<32x128xf32>
    %c8 = arith.constant 8 : index
    %c0_29 = arith.constant 0 : index
    %86 = vector.load %arg3[%c8, %c0_29] : memref<9x128xf32, #tpu.memory_space<vmem>>, vector<1x128xf32>
    %87 = vector.broadcast %86 : vector<1x128xf32> to vector<32x128xf32>
    %88 = arith.mulf %85, %87 : vector<32x128xf32>
    %89 = arith.addf %82, %88 : vector<32x128xf32>
    %c0_30 = arith.constant 0 : index
    %c0_31 = arith.constant 0 : index
    %90 = vector.load %arg4[%c0_30, %c0_31] : memref<1x128xf32, #tpu.memory_space<vmem>>, vector<1x128xf32>
    %91 = vector.broadcast %90 : vector<1x128xf32> to vector<32x128xf32>
    %92 = arith.addf %89, %91 : vector<32x128xf32>
    %cst_32 = arith.constant 0.000000e+00 : f32
    %93 = vector.broadcast %cst_32 : f32 to vector<32x128xf32>
    %94 = arith.cmpf ogt, %92, %93 : vector<32x128xf32>
    %95 = math.exp %92 : vector<32x128xf32>
    %cst_33 = arith.constant 1.000000e+00 : f32
    %96 = vector.broadcast %cst_33 : f32 to vector<32x128xf32>
    %97 = arith.subf %95, %96 : vector<32x128xf32>
    %98 = arith.select %94, %92, %97 : vector<32x128xi1>, vector<32x128xf32>
    %c0_34 = arith.constant 0 : index
    %c0_35 = arith.constant 0 : index
    %99 = vector.load %arg5[%c0_34, %c0_35] : memref<128x128xf32, #tpu.memory_space<vmem>>, vector<128x128xf32>
    %cst_36 = arith.constant dense<0.000000e+00> : vector<32x128xf32>
    %100 = tpu.matmul %98, %99, %cst_36 {dimension_numbers = #tpu.dot_dimension_numbers<[1], [0], [0], [1], [0, 0, 1, 1], [], []>} : vector<32x128xf32>, vector<128x128xf32>, vector<32x128xf32> -> vector<32x128xf32>
    %c0_37 = arith.constant 0 : index
    %c0_38 = arith.constant 0 : index
    %101 = vector.load %arg6[%c0_37, %c0_38] : memref<1x128xf32, #tpu.memory_space<vmem>>, vector<1x128xf32>
    %102 = vector.broadcast %101 : vector<1x128xf32> to vector<32x128xf32>
    %103 = arith.addf %100, %102 : vector<32x128xf32>
    %104 = arith.addf %9, %103 : vector<32x128xf32>
    %c0_39 = arith.constant 0 : index
    %c0_40 = arith.constant 0 : index
    %105 = vector.load %arg7[%c0_39, %c0_40] : memref<32x128xf32, #tpu.memory_space<vmem>>, vector<32x128xf32>
    tpu.vector_store %arg7[%c0_39, %c0_40], %104 {strides = array<i32>} : memref<32x128xf32, #tpu.memory_space<vmem>>, vector<32x128xf32>,
    return
  }
}

</mosaic_0001>

<llo_original>
// kernel: inverse_block.1
$region0: #{inverse_block.1}
  #allocation0 [shape = 'u32[]', space=smem, size = 0x4, offset = 0x4, fixed_abs, tag = 'smem constant byte address 0x4 - core index']
  #allocation1 [shape = 'u32[144,128]{1,0:T(1,128)}', space=vmem, size = 0x12000, scoped, tag = 'internal scratch']
  %s0 = inlined_call_operand.vmem [shape: f32[32,64], index: 0, kind: input, shape index: {}]
  %s1 = inlined_call_operand.vmem [shape: f32[64,256], index: 1, kind: input, shape index: {}]
  %s2 = inlined_call_operand.vmem [shape: f32[1,256], index: 2, kind: input, shape index: {}]
  %s3 = inlined_call_operand.vmem [shape: f32[9,128], index: 3, kind: input, shape index: {}]
  %s4 = inlined_call_operand.vmem [shape: f32[1,128], index: 4, kind: input, shape index: {}]
  %s5 = inlined_call_operand.vmem [shape: f32[128,128], index: 5, kind: input, shape index: {}]
  %s6 = inlined_call_operand.vmem [shape: f32[1,128], index: 6, kind: input, shape index: {}]
  %s7 = inlined_call_operand.vmem [shape: f32[32,128], index: 7, kind: output, shape index: {}]
  %s8 = sld [smem:[#allocation0]]
  $region38: #{inverse_block.1} parent=0
    _
  %s10 = ssub.s32 1, %s8
  %s11 = scalar_select 0, %s10, %s8
  // Predicated region
  $region2: #{inverse_block.1} parent=0 // pred_check
    _
  $region3: #{inverse_block.1} parent=0 // pred_check_branch
    %13 = sbr.rel (0) target = $region5
  $region4: #{inverse_block.1} parent=0 // pred_region
    _
  $region5: #{inverse_block.1} parent=0 // pred_fallthru
    _
  // Predicated region
  $region6: #{inverse_block.1} parent=0 // pred_check
    _
  $region7: #{inverse_block.1} parent=0 // pred_check_branch
    %15 = sbr.rel (0) target = $region9
  $region8: #{inverse_block.1} parent=0 // pred_region
    _
  $region9: #{inverse_block.1} parent=0 // pred_fallthru
    _
  // Predicated region
  $region10: #{inverse_block.1} parent=0 // pred_check
    _
  $region11: #{inverse_block.1} parent=0 // pred_check_branch
    %17 = sbr.rel (0) target = $region13
  $region12: #{inverse_block.1} parent=0 // pred_region
    _
  $region13: #{inverse_block.1} parent=0 // pred_fallthru
    _
  // Predicated region
  $region14: #{inverse_block.1} parent=0 // pred_check
    _
  $region15: #{inverse_block.1} parent=0 // pred_check_branch
    %19 = sbr.rel (0) target = $region17
  $region16: #{inverse_block.1} parent=0 // pred_region
    _
  $region17: #{inverse_block.1} parent=0 // pred_fallthru
    _
  // Predicated region
  $region18: #{inverse_block.1} parent=0 // pred_check
    _
  $region19: #{inverse_block.1} parent=0 // pred_check_branch
    %21 = sbr.rel (0) target = $region21
  $region20: #{inverse_block.1} parent=0 // pred_region
    _
  $region21: #{inverse_block.1} parent=0 // pred_fallthru
    _
  // Predicated region
  $region22: #{inverse_block.1} parent=0 // pred_check
    _
  $region23: #{inverse_block.1} parent=0 // pred_check_branch
    %23 = sbr.rel (0) target = $region25
  $region24: #{inverse_block.1} parent=0 // pred_region
    _
  $region25: #{inverse_block.1} parent=0 // pred_fallthru
    _
  // Predicated region
  $region26: #{inverse_block.1} parent=0 // pred_check
    _
  $region27: #{inverse_block.1} parent=0 // pred_check_branch
    %25 = sbr.rel (0) target = $region29
  $region28: #{inverse_block.1} parent=0 // pred_region
    _
  $region29: #{inverse_block.1} parent=0 // pred_fallthru
    _
  %v26 = vld [vmem:[%s0] sm:$0xff]
  %v27 = vld [vmem:[%s0 + $0x8] sm:$0xff]
  %v28 = vld [vmem:[%s0 + $0x10] sm:$0xff]
  %v29 = vld [vmem:[%s0 + $0x18] sm:$0xff]
  %v30 = vld [vmem:[%s1] sm:$0xff]
  %v31 = vld [vmem:[%s1 + $0x8] sm:$0xff]
  %v32 = vld [vmem:[%s1 + $0x10] sm:$0xff]
  %v33 = vld [vmem:[%s1 + $0x18] sm:$0xff]
  %v34 = vld [vmem:[%s1 + $0x20] sm:$0xff]
  %v35 = vld [vmem:[%s1 + $0x28] sm:$0xff]
  %v36 = vld [vmem:[%s1 + $0x30] sm:$0xff]
  %v37 = vld [vmem:[%s1 + $0x38] sm:$0xff]
  %v38 = vld [vmem:[%s1 + $0x40] sm:$0xff]
  %v39 = vld [vmem:[%s1 + $0x48] sm:$0xff]
  %v40 = vld [vmem:[%s1 + $0x50] sm:$0xff]
  %v41 = vld [vmem:[%s1 + $0x58] sm:$0xff]
  %v42 = vld [vmem:[%s1 + $0x60] sm:$0xff]
  %v43 = vld [vmem:[%s1 + $0x68] sm:$0xff]
  %v44 = vld [vmem:[%s1 + $0x70] sm:$0xff]
  %v45 = vld [vmem:[%s1 + $0x78] sm:$0xff]
  %v46 = vld [vmem:[%s2] sm:$0x3]
  %v48 = vlaneseq
  %v49 = vshrl.u32 %v48, 7
  %v50 = vsub.s32 0, %v49
  %v51 = vrot.slane %v46, %v50
  %v52 = vlaneseq
  %v53 = vshrl.u32 %v52, 7
  %v54 = vsub.s32 1, %v53
  %v55 = vrot.slane %v46, %v54
  %vm58 = vcmask 523264
  %v60 = vsel %vm58, %v26, 0
  %v63 = vsel %vm58, %v27, 0
  %v66 = vsel %vm58, %v28, 0
  %v69 = vsel %vm58, %v29, 0
  %71 = vmatprep.subr.mxu0 %v31
  %72 = vmatpush1.msra.mxu0 %v30
  %73 = vmatprep.subr.mxu0 %v33
  %74 = vmatpush1.msra.mxu0 %v32
  %75 = vmatprep.subr.mxu0 %v35
  %76 = vmatpush1.msra.mxu0 %v34
  %77 = vmatprep.subr.mxu0 %v37
  %78 = vmatpush1.msra.mxu0 %v36
  %79 = vmatprep.subr.mxu0 %v39
  %80 = vmatpush1.msra.mxu0 %v38
  %81 = vmatprep.subr.mxu0 %v41
  %82 = vmatpush1.msra.mxu0 %v40
  %83 = vmatprep.subr.mxu0 %v43
  %84 = vmatpush1.msra.mxu0 %v42
  %85 = vmatprep.subr.mxu0 %v45
  %86 = vmatpush1.msra.mxu0 %v44
  %87 = vmatprep.subr.mxu0 0.0
  %88 = vmatpush1.msra.mxu0 0.0
  %89 = vmatprep.subr.mxu0 0.0
  %90 = vmatpush1.msra.mxu0 0.0
  %91 = vmatprep.subr.mxu0 0.0
  %92 = vmatpush1.msra.mxu0 0.0
  %93 = vmatprep.subr.mxu0 0.0
  %94 = vmatpush1.msra.mxu0 0.0
  %95 = vmatprep.subr.mxu0 0.0
  %96 = vmatpush1.msra.mxu0 0.0
  %97 = vmatprep.subr.mxu0 0.0
  %98 = vmatpush1.msra.mxu0 0.0
  %99 = vmatprep.subr.mxu0 0.0
  %100 = vmatpush1.msra.mxu0 0.0
  %101 = vmatprep.subr.mxu0 0.0
  %102 = vmatpush1.msra.mxu0 0.0
  %103 = vmatprep.subr.mxu0 0.0
  %104 = vmatpush1.msra.mxu0 0.0
  %105 = vmatprep.subr.mxu0 0.0
  %106 = vmatpush1.msra.mxu0 0.0
  %107 = vmatprep.subr.mxu0 0.0
  %108 = vmatpush1.msra.mxu0 0.0
  %109 = vmatprep.subr.mxu0 0.0
  %110 = vmatpush1.msra.mxu0 0.0
  %111 = vmatprep.subr.mxu0 0.0
  %112 = vmatpush1.msra.mxu0 0.0
  %113 = vmatprep.subr.mxu0 0.0
  %114 = vmatpush1.msra.mxu0 0.0
  %115 = vmatprep.subr.mxu0 0.0
  %116 = vmatpush1.msra.mxu0 0.0
  %117 = vmatprep.subr.mxu0 0.0
  %118 = vmatpush1.msra.mxu0 0.0
  %119 = vmatprep.subr.mxu0 0.0
  %120 = vmatpush1.msra.mxu0 0.0
  %121 = vmatprep.subr.mxu0 0.0
  %122 = vmatpush1.msra.mxu0 0.0
  %123 = vmatprep.subr.mxu0 0.0
  %124 = vmatpush1.msra.mxu0 0.0
  %125 = vmatprep.subr.mxu0 0.0
  %126 = vmatpush1.msra.mxu0 0.0
  %127 = vmatprep.subr.mxu0 0.0
  %128 = vmatpush1.msra.mxu0 0.0
  %129 = vmatprep.subr.mxu0 0.0
  %130 = vmatpush1.msra.mxu0 0.0
  %131 = vmatprep.subr.mxu0 0.0
  %132 = vmatpush1.msra.mxu0 0.0
  %133 = vmatprep.subr.mxu0 0.0
  %134 = vmatpush1.msra.mxu0 0.0
  %135 = vmatprep.mubr.f32.mxu0 0.0
  %136 = vmatmul.mubr.f32.gmra.mrb[0].mxu0 %v60
  %v137 = vpop.f32.mrb[0].mxu0
  %v138 = vadd.f32 %v51, %v137
  %v139 = vpop.f32.mrb[0].mxu0
  %v140 = vadd.f32 %v55, %v139
  %141 = vmatprep.mubr.f32.mxu0 0.0
  %142 = vmatmul.mubr.f32.gmra.mrb[0].mxu0 %v63
  %v143 = vpop.f32.mrb[0].mxu0
  %v144 = vadd.f32 %v51, %v143
  %v145 = vpop.f32.mrb[0].mxu0
  %v146 = vadd.f32 %v55, %v145
  %147 = vmatprep.mubr.f32.mxu0 0.0
  %148 = vmatmul.mubr.f32.gmra.mrb[0].mxu0 %v66
  %v149 = vpop.f32.mrb[0].mxu0
  %v150 = vadd.f32 %v51, %v149
  %v151 = vpop.f32.mrb[0].mxu0
  %v152 = vadd.f32 %v55, %v151
  %153 = vmatprep.mubr.f32.mxu0 0.0
  %154 = vmatmul.mubr.f32.gmra.mrb[0].mxu0 %v69
  %v155 = vpop.f32.mrb[0].mxu0
  %v156 = vadd.f32 %v51, %v155
  %v157 = vpop.f32.mrb[0].mxu0
  %v158 = vadd.f32 %v55, %v157
  %159 = vdwg.mxu0
  %v160 = vmax.f32 %v140, 0.0
  %v161 = vmax.f32 %v146, 0.0
  %v162 = vmax.f32 %v152, 0.0
  %v163 = vmax.f32 %v158, 0.0
  %v164 = vlaneseq
  %v165 = vshrl.u32 %v164, 7
  %v166 = vadd.s32 %v165, 8
  %v167 = vadd.s32 %v165, 16
  %v168 = vadd.s32 %v165, 24
  %vm169 = vcmp.lt.s32.totalorder %v165, 0
  %v170 = vsub.s32 0, %v165
  %v171 = vsel %vm169, %v170, %v165
  %v172 = vshrl.u32 %v171, 4
  %v173 = vand.u32 %v171, 15
  %v174 = vsub.s32 0, %v173
  %v175 = vsel %vm169, %v174, %v173
  %vm176 = vcmp.lt.s32.totalorder %v166, 0
  %v177 = vsub.s32 0, %v166
  %v178 = vsel %vm176, %v177, %v166
  %v179 = vshrl.u32 %v178, 4
  %v180 = vand.u32 %v178, 15
  %v181 = vsub.s32 0, %v180
  %v182 = vsel %vm176, %v181, %v180
  %vm183 = vcmp.lt.s32.totalorder %v167, 0
  %v184 = vsub.s32 0, %v167
  %v185 = vsel %vm183, %v184, %v167
  %v186 = vshrl.u32 %v185, 4
  %v187 = vand.u32 %v185, 15
  %v188 = vsub.s32 0, %v187
  %v189 = vsel %vm183, %v188, %v187
  %vm190 = vcmp.lt.s32.totalorder %v168, 0
  %v191 = vsub.s32 0, %v168
  %v192 = vsel %vm190, %v191, %v168
  %v193 = vshrl.u32 %v192, 4
  %v194 = vand.u32 %v192, 15
  %v195 = vsub.s32 0, %v194
  %v196 = vsel %vm190, %v195, %v194
  %vm197 = vcmp.ne.s32.totalorder %v175, 0
  %vm198 = vcmp.ne.s32.totalorder %v182, 0
  %vm199 = vcmp.ne.s32.totalorder %v189, 0
  %vm200 = vcmp.ne.s32.totalorder %v196, 0
  %vm201 = vcmp.lt.s32.totalorder %v175, 0
  %vm202 = vcmp.lt.s32.totalorder %v182, 0
  %vm203 = vcmp.lt.s32.totalorder %v189, 0
  %vm204 = vcmp.lt.s32.totalorder %v196, 0
  %vm205 = vmand %vm201, %vm197
  %vm206 = vmand %vm202, %vm198
  %vm207 = vmand %vm203, %vm199
  %vm208 = vmand %vm204, %vm200
  %v209 = vadd.s32 %v175, 16
  %v210 = vadd.s32 %v182, 16
  %v211 = vadd.s32 %v189, 16
  %v212 = vadd.s32 %v196, 16
  %v213 = vsel %vm205, %v209, %v175
  %v214 = vsel %vm206, %v210, %v182
  %v215 = vsel %vm207, %v211, %v189
  %v216 = vsel %vm208, %v212, %v196
  %vm217 = vcmp.ne.s32.totalorder %v213, 0
  %vm218 = vcmp.ne.s32.totalorder %v214, 0
  %vm219 = vcmp.ne.s32.totalorder %v215, 0
  %vm220 = vcmp.ne.s32.totalorder %v216, 0
  %v221 = vsel %vm217, 1, 0
  %v222 = vsel %vm218, 1, 0
  %v223 = vsel %vm219, 1, 0
  %v224 = vsel %vm220, 1, 0
  %v225 = vcvt.s32.f32 %v221
  %v226 = vcvt.s32.f32 %v222
  %v227 = vcvt.s32.f32 %v223
  %v228 = vcvt.s32.f32 %v224
  %vm229 = vcmp.ne.s32.totalorder %v213, 15
  %vm230 = vcmp.ne.s32.totalorder %v214, 15
  %vm231 = vcmp.ne.s32.totalorder %v215, 15
  %vm232 = vcmp.ne.s32.totalorder %v216, 15
  %v233 = vsel %vm229, 1, 0
  %v234 = vsel %vm230, 1, 0
  %v235 = vsel %vm231, 1, 0
  %v236 = vsel %vm232, 1, 0
  %v237 = vcvt.s32.f32 %v233
  %v238 = vcvt.s32.f32 %v234
  %v239 = vcvt.s32.f32 %v235
  %v240 = vcvt.s32.f32 %v236
  %v241 = vrot.slane %v138, 7
  %v242 = vrot.slane %v144, 7
  %v243 = vrot.slane %v150, 7
  %v244 = vrot.slane %v156, 7
  %vm245 = vcmp.lt.s32.totalorder %v165, 1
  %v246 = vsel %vm245, %v243, %v244
  %v247 = vsel %vm245, %v242, %v243
  %v248 = vsel %vm245, %v241, %v242
  %v249 = vsel %vm245, %v244, %v241
  %250 = vrot.lane.b32.xlu0 %v249, 8
  %v251 = vpop.permute.xlu0 %250
  %252 = vrot.lane.b32.xlu0 %v248, 8
  %v253 = vpop.permute.xlu0 %252
  %254 = vrot.lane.b32.xlu0 %v247, 8
  %v255 = vpop.permute.xlu0 %254
  %256 = vrot.lane.b32.xlu0 %v246, 8
  %v257 = vpop.permute.xlu0 %256
  %v258 = vmul.f32 %v251, %v225
  %v259 = vmul.f32 %v253, %v226
  %v260 = vmul.f32 %v255, %v227
  %v261 = vmul.f32 %v257, %v228
  %v262 = vld [vmem:[%s3] sm:$0x1]
  %v263 = vlaneseq
  %v264 = vshrl.u32 %v263, 7
  %v265 = vsub.s32 0, %v264
  %v266 = vrot.slane %v262, %v265
  %v267 = vmul.f32 %v258, %v266
  %v268 = vmul.f32 %v259, %v266
  %v269 = vmul.f32 %v260, %v266
  %v270 = vmul.f32 %v261, %v266
  %v271 = vadd.f32 %v267, 0.0
  %v272 = vadd.f32 %v268, 0.0
  %v273 = vadd.f32 %v269, 0.0
  %v274 = vadd.f32 %v270, 0.0
  %v275 = vmul.f32 %v249, %v225
  %v276 = vmul.f32 %v248, %v226
  %v277 = vmul.f32 %v247, %v227
  %v278 = vmul.f32 %v246, %v228
  %v279 = vld [vmem:[%s3 + $0x1] sm:$0x1]
  %v280 = vlaneseq
  %v281 = vshrl.u32 %v280, 7
  %v282 = vsub.s32 0, %v281
  %v283 = vrot.slane %v279, %v282
  %v284 = vmul.f32 %v275, %v283
  %v285 = vmul.f32 %v276, %v283
  %v286 = vmul.f32 %v277, %v283
  %v287 = vmul.f32 %v278, %v283
  %v288 = vadd.f32 %v271, %v284
  %v289 = vadd.f32 %v272, %v285
  %v290 = vadd.f32 %v273, %v286
  %v291 = vadd.f32 %v274, %v287
  %292 = vrot.lane.b32.xlu0 %v249, 120
  %v293 = vpop.permute.xlu0 %292
  %294 = vrot.lane.b32.xlu0 %v248, 120
  %v295 = vpop.permute.xlu0 %294
  %296 = vrot.lane.b32.xlu0 %v247, 120
  %v297 = vpop.permute.xlu0 %296
  %298 = vrot.lane.b32.xlu0 %v246, 120
  %v299 = vpop.permute.xlu0 %298
  %v300 = vmul.f32 %v293, %v225
  %v301 = vmul.f32 %v295, %v226
  %v302 = vmul.f32 %v297, %v227
  %v303 = vmul.f32 %v299, %v228
  %v304 = vld [vmem:[%s3 + $0x2] sm:$0x1]
  %v305 = vlaneseq
  %v306 = vshrl.u32 %v305, 7
  %v307 = vsub.s32 0, %v306
  %v308 = vrot.slane %v304, %v307
  %v309 = vmul.f32 %v300, %v308
  %v310 = vmul.f32 %v301, %v308
  %v311 = vmul.f32 %v302, %v308
  %v312 = vmul.f32 %v303, %v308
  %v313 = vadd.f32 %v288, %v309
  %v314 = vadd.f32 %v289, %v310
  %v315 = vadd.f32 %v290, %v311
  %v316 = vadd.f32 %v291, %v312
  %317 = vrot.lane.b32.xlu0 %v138, 8
  %v318 = vpop.permute.xlu0 %317
  %319 = vrot.lane.b32.xlu0 %v144, 8
  %v320 = vpop.permute.xlu0 %319
  %321 = vrot.lane.b32.xlu0 %v150, 8
  %v322 = vpop.permute.xlu0 %321
  %323 = vrot.lane.b32.xlu0 %v156, 8
  %v324 = vpop.permute.xlu0 %323
  %v325 = vld [vmem:[%s3 + $0x3] sm:$0x1]
  %v326 = vlaneseq
  %v327 = vshrl.u32 %v326, 7
  %v328 = vsub.s32 0, %v327
  %v329 = vrot.slane %v325, %v328
  %v330 = vmul.f32 %v318, %v329
  %v331 = vmul.f32 %v320, %v329
  %v332 = vmul.f32 %v322, %v329
  %v333 = vmul.f32 %v324, %v329
  %v334 = vadd.f32 %v313, %v330
  %v335 = vadd.f32 %v314, %v331
  %v336 = vadd.f32 %v315, %v332
  %v337 = vadd.f32 %v316, %v333
  %v338 = vld [vmem:[%s3 + $0x4] sm:$0x1]
  %v339 = vlaneseq
  %v340 = vshrl.u32 %v339, 7
  %v341 = vsub.s32 0, %v340
  %v342 = vrot.slane %v338, %v341
  %v343 = vmul.f32 %v138, %v342
  %v344 = vmul.f32 %v144, %v342
  %v345 = vmul.f32 %v150, %v342
  %v346 = vmul.f32 %v156, %v342
  %v347 = vadd.f32 %v334, %v343
  %v348 = vadd.f32 %v335, %v344
  %v349 = vadd.f32 %v336, %v345
  %v350 = vadd.f32 %v337, %v346
  %351 = vrot.lane.b32.xlu0 %v138, 120
  %v352 = vpop.permute.xlu0 %351
  %353 = vrot.lane.b32.xlu0 %v144, 120
  %v354 = vpop.permute.xlu0 %353
  %355 = vrot.lane.b32.xlu0 %v150, 120
  %v356 = vpop.permute.xlu0 %355
  %357 = vrot.lane.b32.xlu0 %v156, 120
  %v358 = vpop.permute.xlu0 %357
  %v359 = vld [vmem:[%s3 + $0x5] sm:$0x1]
  %v360 = vlaneseq
  %v361 = vshrl.u32 %v360, 7
  %v362 = vsub.s32 0, %v361
  %v363 = vrot.slane %v359, %v362
  %v364 = vmul.f32 %v352, %v363
  %v365 = vmul.f32 %v354, %v363
  %v366 = vmul.f32 %v356, %v363
  %v367 = vmul.f32 %v358, %v363
  %v368 = vadd.f32 %v347, %v364
  %v369 = vadd.f32 %v348, %v365
  %v370 = vadd.f32 %v349, %v366
  %v371 = vadd.f32 %v350, %v367
  %v372 = vrot.slane %v138, 1
  %v373 = vrot.slane %v144, 1
  %v374 = vrot.slane %v150, 1
  %v375 = vrot.slane %v156, 1
  %vm376 = vcmp.lt.s32.totalorder %v165, 7
  %v377 = vsel %vm376, %v374, %v375
  %v378 = vsel %vm376, %v373, %v374
  %v379 = vsel %vm376, %v372, %v373
  %v380 = vsel %vm376, %v375, %v372
  %381 = vrot.lane.b32.xlu0 %v379, 8
  %v382 = vpop.permute.xlu0 %381
  %383 = vrot.lane.b32.xlu0 %v378, 8
  %v384 = vpop.permute.xlu0 %383
  %385 = vrot.lane.b32.xlu0 %v377, 8
  %v386 = vpop.permute.xlu0 %385
  %387 = vrot.lane.b32.xlu0 %v380, 8
  %v388 = vpop.permute.xlu0 %387
  %v389 = vmul.f32 %v382, %v237
  %v390 = vmul.f32 %v384, %v238
  %v391 = vmul.f32 %v386, %v239
  %v392 = vmul.f32 %v388, %v240
  %v393 = vld [vmem:[%s3 + $0x6] sm:$0x1]
  %v394 = vlaneseq
  %v395 = vshrl.u32 %v394, 7
  %v396 = vsub.s32 0, %v395
  %v397 = vrot.slane %v393, %v396
  %v398 = vmul.f32 %v389, %v397
  %v399 = vmul.f32 %v390, %v397
  %v400 = vmul.f32 %v391, %v397
  %v401 = vmul.f32 %v392, %v397
  %v402 = vadd.f32 %v368, %v398
  %v403 = vadd.f32 %v369, %v399
  %v404 = vadd.f32 %v370, %v400
  %v405 = vadd.f32 %v371, %v401
  %v406 = vmul.f32 %v379, %v237
  %v407 = vmul.f32 %v378, %v238
  %v408 = vmul.f32 %v377, %v239
  %v409 = vmul.f32 %v380, %v240
  %v410 = vld [vmem:[%s3 + $0x7] sm:$0x1]
  %v411 = vlaneseq
  %v412 = vshrl.u32 %v411, 7
  %v413 = vsub.s32 0, %v412
  %v414 = vrot.slane %v410, %v413
  %v415 = vmul.f32 %v406, %v414
  %v416 = vmul.f32 %v407, %v414
  %v417 = vmul.f32 %v408, %v414
  %v418 = vmul.f32 %v409, %v414
  %v419 = vadd.f32 %v402, %v415
  %v420 = vadd.f32 %v403, %v416
  %v421 = vadd.f32 %v404, %v417
  %v422 = vadd.f32 %v405, %v418
  %423 = vrot.lane.b32.xlu0 %v379, 120
  %v424 = vpop.permute.xlu0 %423
  %425 = vrot.lane.b32.xlu0 %v378, 120
  %v426 = vpop.permute.xlu0 %425
  %427 = vrot.lane.b32.xlu0 %v377, 120
  %v428 = vpop.permute.xlu0 %427
  %429 = vrot.lane.b32.xlu0 %v380, 120
  %v430 = vpop.permute.xlu0 %429
  %v431 = vmul.f32 %v424, %v237
  %v432 = vmul.f32 %v426, %v238
  %v433 = vmul.f32 %v428, %v239
  %v434 = vmul.f32 %v430, %v240
  %v435 = vld [vmem:[%s3 + $0x8] sm:$0x1]
  %v436 = vlaneseq
  %v437 = vshrl.u32 %v436, 7
  %v438 = vsub.s32 0, %v437
  %v439 = vrot.slane %v435, %v438
  %v440 = vmul.f32 %v431, %v439
  %v441 = vmul.f32 %v432, %v439
  %v442 = vmul.f32 %v433, %v439
  %v443 = vmul.f32 %v434, %v439
  %v444 = vadd.f32 %v419, %v440
  %v445 = vadd.f32 %v420, %v441
  %v446 = vadd.f32 %v421, %v442
  %v447 = vadd.f32 %v422, %v443
  %v448 = vld [vmem:[%s4] sm:$0x1]
  %v450 = vlaneseq
  %v451 = vshrl.u32 %v450, 7
  %v452 = vsub.s32 0, %v451
  %v453 = vrot.slane %v448, %v452
  %v455 = vadd.f32 %v444, %v453
  %v456 = vadd.f32 %v445, %v453
  %v457 = vadd.f32 %v446, %v453
  %v458 = vadd.f32 %v447, %v453
  %vm459 = vcmp.gt.f32.partialorder %v455, 0.0
  %vm460 = vcmp.gt.f32.partialorder %v456, 0.0
  %vm461 = vcmp.gt.f32.partialorder %v457, 0.0
  %vm462 = vcmp.gt.f32.partialorder %v458, 0.0
  %v463 = vmul.f32 %v455, 1.442695
  %v464 = vpow.pop %v463
  %v465 = vmul.f32 %v456, 1.442695
  %v466 = vpow.pop %v465
  %v467 = vmul.f32 %v457, 1.442695
  %v468 = vpow.pop %v467
  %v469 = vmul.f32 %v458, 1.442695
  %v470 = vpow.pop %v469
  %v471 = vsub.f32 %v464, 1.0
  %v472 = vsub.f32 %v466, 1.0
  %v473 = vsub.f32 %v468, 1.0
  %v474 = vsub.f32 %v470, 1.0
  %v475 = vsel %vm459, %v455, %v471
  %v476 = vsel %vm460, %v456, %v472
  %v477 = vsel %vm461, %v457, %v473
  %v478 = vsel %vm462, %v458, %v474
  %v479 = vld [vmem:[%s5] sm:$0xff]
  %v480 = vld [vmem:[%s5 + $0x8] sm:$0xff]
  %v481 = vld [vmem:[%s5 + $0x10] sm:$0xff]
  %v482 = vld [vmem:[%s5 + $0x18] sm:$0xff]
  %v483 = vld [vmem:[%s5 + $0x20] sm:$0xff]
  %v484 = vld [vmem:[%s5 + $0x28] sm:$0xff]
  %v485 = vld [vmem:[%s5 + $0x30] sm:$0xff]
  %v486 = vld [vmem:[%s5 + $0x38] sm:$0xff]
  %v487 = vld [vmem:[%s5 + $0x40] sm:$0xff]
  %v488 = vld [vmem:[%s5 + $0x48] sm:$0xff]
  %v489 = vld [vmem:[%s5 + $0x50] sm:$0xff]
  %v490 = vld [vmem:[%s5 + $0x58] sm:$0xff]
  %v491 = vld [vmem:[%s5 + $0x60] sm:$0xff]
  %v492 = vld [vmem:[%s5 + $0x68] sm:$0xff]
  %v493 = vld [vmem:[%s5 + $0x70] sm:$0xff]
  %v494 = vld [vmem:[%s5 + $0x78] sm:$0xff]
  %v495 = vld [vmem:[%s6] sm:$0x1]
  %v497 = vlaneseq
  %v498 = vshrl.u32 %v497, 7
  %v499 = vsub.s32 0, %v498
  %v500 = vrot.slane %v495, %v499
  %502 = vmatprep.subr.mxu0 0.0
  %503 = vmatpush1.msra.mxu0 %v479
  %504 = vmatprep.subr.mxu0 0.0
  %505 = vmatpush1.msra.mxu0 %v480
  %506 = vmatprep.subr.mxu0 0.0
  %507 = vmatpush1.msra.mxu0 %v481
  %508 = vmatprep.subr.mxu0 0.0
  %509 = vmatpush1.msra.mxu0 %v482
  %510 = vmatprep.subr.mxu0 0.0
  %511 = vmatpush1.msra.mxu0 %v483
  %512 = vmatprep.subr.mxu0 0.0
  %513 = vmatpush1.msra.mxu0 %v484
  %514 = vmatprep.subr.mxu0 0.0
  %515 = vmatpush1.msra.mxu0 %v485
  %516 = vmatprep.subr.mxu0 0.0
  %517 = vmatpush1.msra.mxu0 %v486
  %518 = vmatprep.subr.mxu0 0.0
  %519 = vmatpush1.msra.mxu0 %v487
  %520 = vmatprep.subr.mxu0 0.0
  %521 = vmatpush1.msra.mxu0 %v488
  %522 = vmatprep.subr.mxu0 0.0
  %523 = vmatpush1.msra.mxu0 %v489
  %524 = vmatprep.subr.mxu0 0.0
  %525 = vmatpush1.msra.mxu0 %v490
  %526 = vmatprep.subr.mxu0 0.0
  %527 = vmatpush1.msra.mxu0 %v491
  %528 = vmatprep.subr.mxu0 0.0
  %529 = vmatpush1.msra.mxu0 %v492
  %530 = vmatprep.subr.mxu0 0.0
  %531 = vmatpush1.msra.mxu0 %v493
  %532 = vmatprep.subr.mxu0 0.0
  %533 = vmatpush1.msra.mxu0 %v494
  %534 = vmatprep.subr.mxu0 0.0
  %535 = vmatpush1.msra.mxu0 0.0
  %536 = vmatprep.subr.mxu0 0.0
  %537 = vmatpush1.msra.mxu0 0.0
  %538 = vmatprep.subr.mxu0 0.0
  %539 = vmatpush1.msra.mxu0 0.0
  %540 = vmatprep.subr.mxu0 0.0
  %541 = vmatpush1.msra.mxu0 0.0
  %542 = vmatprep.subr.mxu0 0.0
  %543 = vmatpush1.msra.mxu0 0.0
  %544 = vmatprep.subr.mxu0 0.0
  %545 = vmatpush1.msra.mxu0 0.0
  %546 = vmatprep.subr.mxu0 0.0
  %547 = vmatpush1.msra.mxu0 0.0
  %548 = vmatprep.subr.mxu0 0.0
  %549 = vmatpush1.msra.mxu0 0.0
  %550 = vmatprep.subr.mxu0 0.0
  %551 = vmatpush1.msra.mxu0 0.0
  %552 = vmatprep.subr.mxu0 0.0
  %553 = vmatpush1.msra.mxu0 0.0
  %554 = vmatprep.subr.mxu0 0.0
  %555 = vmatpush1.msra.mxu0 0.0
  %556 = vmatprep.subr.mxu0 0.0
  %557 = vmatpush1.msra.mxu0 0.0
  %558 = vmatprep.subr.mxu0 0.0
  %559 = vmatpush1.msra.mxu0 0.0
  %560 = vmatprep.subr.mxu0 0.0
  %561 = vmatpush1.msra.mxu0 0.0
  %562 = vmatprep.subr.mxu0 0.0
  %563 = vmatpush1.msra.mxu0 0.0
  %564 = vmatprep.subr.mxu0 0.0
  %565 = vmatpush1.msra.mxu0 0.0
  %566 = vmatprep.mubr.f32.mxu0 0.0
  %567 = vmatmul.mubr.f32.gmra.mrb[0].mxu0 %v475
  %v568 = vpop.f32.mrb[0].mxu0
  %v569 = vadd.f32 %v500, %v568
  %v570 = vpop.f32.mrb[0].mxu0
  %571 = vmatprep.mubr.f32.mxu0 0.0
  %572 = vmatmul.mubr.f32.gmra.mrb[0].mxu0 %v476
  %v573 = vpop.f32.mrb[0].mxu0
  %v574 = vadd.f32 %v500, %v573
  %v575 = vpop.f32.mrb[0].mxu0
  %576 = vmatprep.mubr.f32.mxu0 0.0
  %577 = vmatmul.mubr.f32.gmra.mrb[0].mxu0 %v477
  %v578 = vpop.f32.mrb[0].mxu0
  %v579 = vadd.f32 %v500, %v578
  %v580 = vpop.f32.mrb[0].mxu0
  %581 = vmatprep.mubr.f32.mxu0 0.0
  %582 = vmatmul.mubr.f32.gmra.mrb[0].mxu0 %v478
  %v583 = vpop.f32.mrb[0].mxu0
  %v584 = vadd.f32 %v500, %v583
  %v585 = vpop.f32.mrb[0].mxu0
  %586 = vdwg.mxu0
  %v587 = vadd.f32 %v160, %v569
  %v588 = vadd.f32 %v161, %v574
  %v589 = vadd.f32 %v162, %v579
  %v590 = vadd.f32 %v163, %v584
  %591 = vst [vmem:[%s7] sm:$0xff] %v587
  %592 = vst [vmem:[%s7 + $0x8] sm:$0xff] %v588
  %593 = vst [vmem:[%s7 + $0x10] sm:$0xff] %v589
  %594 = vst [vmem:[%s7 + $0x18] sm:$0xff] %v590
  // Predicated region
  $region30: #{inverse_block.1} parent=0 // pred_check
    _
  $region31: #{inverse_block.1} parent=0 // pred_check_branch
    %596 = sbr.rel (0) target = $region33
  $region32: #{inverse_block.1} parent=0 // pred_region
    _
  $region33: #{inverse_block.1} parent=0 // pred_fallthru
    _
  // Predicated region
  $region34: #{inverse_block.1} parent=0 // pred_check
    _
  $region35: #{inverse_block.1} parent=0 // pred_check_branch
    %598 = sbr.rel (0) target = $region37
  $region36: #{inverse_block.1} parent=0 // pred_region
    _
  $region37: #{inverse_block.1} parent=0 // pred_fallthru
    _

</llo_original>
